<compile_context>
chip_gen: v7x
topology: tpu7x:2x2x1
jax: 0.10.0
libtpu: 0.0.40
codegen_flags: <defaults>
</compile_context>

<pallas_src>
import functools
import math

import jax
import jax.numpy as jnp
import numpy as np
from jax.experimental import pallas as pl
from jax.experimental.pallas import tpu as pltpu

_EPS = 1e-6
# Scoped-VMEM budget requested from Mosaic.  48 MiB is safe on v5e/v6e
# (128 MiB physical); re-derive (halve tiles) for v7x's 64 MiB.
_VMEM_LIMIT_BYTES = 48 * 1024 * 1024


# ----------------------------------------------------------------------------
# in-kernel math helpers
# ----------------------------------------------------------------------------
def _gelu_tanh(x):
    # tanh-based GELU: the transcendental runs on the EUP slot instead of a
    # ~12-op VPU erf polynomial.  Max abs deviation from exact erf-GELU ~5e-4.
    c = 0.7978845608028654  # sqrt(2/pi)
    return 0.5 * x * (1.0 + jnp.tanh(c * (x + 0.044715 * x * x * x)))


def _pick_block(n, target, mult=8):
    """Largest block <= target that divides n and is sublane friendly."""
    b = min(target, n)
    while b > 1:
        if n % b == 0 and (b % mult == 0 or b == n):
            return b
        b -= 1
    return n


# ----------------------------------------------------------------------------
# Kernel 1: AdaRMSNorm + qkv projection (row-tiled)
# ----------------------------------------------------------------------------
def _qkv_kernel(x_ref, cond_ref, wn_ref, wq_ref, wk_ref, wv_ref,
                q_ref, k_ref, v_ref, *, eps, compute_dtype):
    x = x_ref[0].astype(jnp.float32)                      # (tS, D)
    cond = cond_ref[0].astype(jnp.float32)                # (1, CF)
    ada = jnp.dot(cond, wn_ref[...].astype(jnp.float32),
                  preferred_element_type=jnp.float32) + 1.0           # (1, D)
    mean_sq = jnp.mean(x * x, axis=-1, keepdims=True)
    xn = (x * (jax.lax.rsqrt(mean_sq + eps) * ada)).astype(compute_dtype)
    q_ref[0] = jnp.dot(xn, wq_ref[...],
                       preferred_element_type=jnp.float32).astype(q_ref.dtype)
    k_ref[0] = jnp.dot(xn, wk_ref[...],
                       preferred_element_type=jnp.float32).astype(k_ref.dtype)
    v_ref[0] = jnp.dot(xn, wv_ref[...],
                       preferred_element_type=jnp.float32).astype(v_ref.dtype)


# ----------------------------------------------------------------------------
# Kernel 2: flash-style attention with online softmax, heads batched in-kernel
# ----------------------------------------------------------------------------
def _flash_attn_kernel(scale_ref, q_ref, k_ref, v_ref,
                       cq_ref, sq_ref, ck_ref, sk_ref,
                       o_ref, q_sc, m_sc, l_sc, acc_sc,
                       *, rot, eps, compute_dtype):
    ki = pl.program_id(2)
    sqrt_scale = scale_ref[...]                           # (nh, 1, 1) f32

    def prep(z, cos_t, sin_t):
        # cosine-sim scaling (sqrt(scale) * L2-normalize) followed by axial
        # RoPE on the first 2*rot dims of each head.  Element-wise math in f32.
        z = z.astype(jnp.float32)                         # (nh, t, dh)
        z = z * (sqrt_scale *
                 jax.lax.rsqrt(jnp.sum(z * z, axis=-1, keepdims=True) + eps))
        z1, z2, z3 = z[..., :rot], z[..., rot:2 * rot], z[..., 2 * rot:]
        return jnp.concatenate(
            [z1 * cos_t - z2 * sin_t, z2 * cos_t + z1 * sin_t, z3],
            axis=-1).astype(compute_dtype)

    @pl.when(ki == 0)
    def _init():
        m_sc[...] = jnp.full(m_sc.shape, -jnp.inf, m_sc.dtype)
        l_sc[...] = jnp.zeros(l_sc.shape, l_sc.dtype)
        acc_sc[...] = jnp.zeros(acc_sc.shape, acc_sc.dtype)
        # Q prep is constant over the kv sweep -> compute once, keep in VMEM.
        q_sc[...] = prep(q_ref[0], cq_ref[0], sq_ref[0])

    q = q_sc[...]                                         # (nh, tq, dh)
    k = prep(k_ref[0], ck_ref[0], sk_ref[0])              # (nh, tk, dh)
    v = v_ref[0]                                          # (nh, tk, dh)

    # head-batched QK^T on the MXU (scale already folded into q/k)
    s = jnp.einsum('hqd,hkd->hqk', q, k,
                   preferred_element_type=jnp.float32)    # (nh, tq, tk)

    m_prev = m_sc[...]
    m_new = jnp.maximum(m_prev, jnp.max(s, axis=-1, keepdims=True))
    alpha = jnp.exp(m_prev - m_new)
    p = jnp.exp(s - m_new)
    l_sc[...] = alpha * l_sc[...] + jnp.sum(p, axis=-1, keepdims=True)
    acc_sc[...] = alpha * acc_sc[...] + jnp.einsum(
        'hqk,hkd->hqd', p.astype(compute_dtype), v,
        preferred_element_type=jnp.float32)
    m_sc[...] = m_new

    @pl.when(ki == pl.num_programs(2) - 1)
    def _fin():
        approx = bool(jnp.dtype(compute_dtype) != jnp.dtype(jnp.float32))
        inv_l = pl.reciprocal(l_sc[...], approx=approx)
        o_ref[0] = (acc_sc[...] * inv_l).astype(o_ref.dtype)


# ----------------------------------------------------------------------------
# Kernel 3: out-proj + residual + AdaRMSNorm + GEGLU FF + residual (fused)
# ----------------------------------------------------------------------------
def _out_ff_kernel(attn_ref, x_ref, cond_ref, wo_ref, wn_ref,
                   wua_ref, wug_ref, wd_ref, o_ref, *, eps, compute_dtype):
    attn = attn_ref[0]                                    # (tS, D) compute dtype
    x = x_ref[0].astype(jnp.float32)                      # (tS, D)
    h = jnp.dot(attn, wo_ref[...],
                preferred_element_type=jnp.float32) + x   # residual 1 (f32)

    cond = cond_ref[0].astype(jnp.float32)
    ada = jnp.dot(cond, wn_ref[...].astype(jnp.float32),
                  preferred_element_type=jnp.float32) + 1.0
    mean_sq = jnp.mean(h * h, axis=-1, keepdims=True)
    xn = (h * (jax.lax.rsqrt(mean_sq + eps) * ada)).astype(compute_dtype)

    a = jnp.dot(xn, wua_ref[...], preferred_element_type=jnp.float32)
    g = jnp.dot(xn, wug_ref[...], preferred_element_type=jnp.float32)
    hidden = (a * _gelu_tanh(g)).astype(compute_dtype)
    y = jnp.dot(hidden, wd_ref[...], preferred_element_type=jnp.float32)
    o_ref[0] = (y + h).astype(o_ref.dtype)                # residual 2


# ----------------------------------------------------------------------------
# parameters / RoPE tables
# ----------------------------------------------------------------------------
def init_params(key, d_model, d_ff, d_head, cond_features):
    n_heads = d_model // d_head
    ks = jax.random.split(key, 6)

    def lin(k, fan_in, fan_out):
        return jax.random.normal(k, (fan_in, fan_out), jnp.float32) / math.sqrt(fan_in)

    params = dict(
        d_model=d_model, d_ff=d_ff, d_head=d_head, n_heads=n_heads,
        cond_features=cond_features,
        # NOTE: out_proj / down_proj / AdaRMSNorm linears are zero_init in the
        # torch module; deterministic random values are used here so the
        # kernel path is numerically non-trivial.
        w_norm_attn=lin(ks[0], cond_features, d_model),
        w_qkv=lin(ks[1], d_model, 3 * d_model),
        w_out=lin(ks[2], d_model, d_model),
        attn_scale=jnp.full((n_heads,), 10.0, jnp.float32),
        w_norm_ff=lin(ks[3], cond_features, d_model),
        w_up=lin(ks[4], d_model, 2 * d_ff),
        w_down=lin(ks[5], d_ff, d_model),
    )
    # AxialRoPE frequencies: AxialRoPE(dim=d_head // 2, n_heads)
    dim = d_head // 2
    n_freq = n_heads * dim // 4
    freqs = jnp.exp(jnp.linspace(math.log(math.pi), math.log(10.0 * math.pi),
                                 n_freq + 1)[:-1])
    params['rope_freqs'] = freqs.reshape(dim // 4, n_heads).T    # (nh, d_head//8)
    return params


def _compute_theta(pos, params):
    # pos: (N, H, W, 2) -> theta: (N, S, n_heads, rot) with rot = d_head // 4
    N, H, W, _ = pos.shape
    p = pos.reshape(N, H * W, 2).astype(jnp.float32)
    freqs = params['rope_freqs']                          # (nh, d_head//8)
    theta_h = p[..., None, 0:1] * freqs                   # (N, S, nh, d_head//8)
    theta_w = p[..., None, 1:2] * freqs
    return jnp.concatenate([theta_h, theta_w], axis=-1)   # (N, S, nh, rot)


# ----------------------------------------------------------------------------
# wrapper
# ----------------------------------------------------------------------------
def global_transformer_layer(x, pos, cond, params, *, compute_dtype=jnp.float32,
                             block_q=256, block_kv=256, block_rows=256):
    # checkpoint() in torch only affects backward; forward semantics identical.
    # dropout=0.0 in the spec -> identity, omitted.
    N, H, W, D = x.shape
    S = H * W
    nh = params['n_heads']
    dh = params['d_head']
    d_ff = params['d_ff']
    CF = params['cond_features']
    rot = dh // 4
    cdt = jnp.dtype(compute_dtype)
    isz = cdt.itemsize

    bq = _pick_block(S, block_q)
    bkv = _pick_block(S, block_kv)
    br = _pick_block(S, block_rows)

    x_flat = x.reshape(N, S, D)
    cond3 = cond[:, None, :].astype(jnp.float32)          # (N, 1, CF)

    sem2 = pltpu.CompilerParams(dimension_semantics=("parallel", "parallel"),
                                vmem_limit_bytes=_VMEM_LIMIT_BYTES)

    # ---- stage 1: AdaRMSNorm + qkv projection --------------------------------
    wq = params['w_qkv'][:, :D].astype(cdt)
    wk = params['w_qkv'][:, D:2 * D].astype(cdt)
    wv = params['w_qkv'][:, 2 * D:].astype(cdt)
    q, k, v = pl.pallas_call(
        functools.partial(_qkv_kernel, eps=_EPS, compute_dtype=cdt),
        out_shape=[jax.ShapeDtypeStruct((N, S, D), cdt)] * 3,
        grid=(N, S // br),
        in_specs=[
            pl.BlockSpec((1, br, D), lambda b, s: (b, s, 0)),
            pl.BlockSpec((1, 1, CF), lambda b, s: (b, 0, 0)),
            pl.BlockSpec((CF, D), lambda b, s: (0, 0)),
            pl.BlockSpec((D, D), lambda b, s: (0, 0)),
            pl.BlockSpec((D, D), lambda b, s: (0, 0)),
            pl.BlockSpec((D, D), lambda b, s: (0, 0)),
        ],
        out_specs=[pl.BlockSpec((1, br, D), lambda b, s: (b, s, 0))] * 3,
        compiler_params=sem2,
        cost_estimate=pl.CostEstimate(
            flops=2 * N * S * D * 3 * D,
            transcendentals=0,
            bytes_accessed=N * S * D * (4 + 3 * isz) + (3 * D * D + CF * D) * isz),
    )(x_flat, cond3, params['w_norm_attn'].astype(jnp.float32), wq, wk, wv)

    # head-major layout (N, nh, S, dh) so the flash kernel gets head-batched
    # blocks via BlockSpec (no in-kernel per-head slicing / concat).
    def to_heads(t):
        return t.reshape(N, S, nh, dh).transpose(0, 2, 1, 3)
    qh, kh, vh = to_heads(q), to_heads(k), to_heads(v)

    # RoPE tables: cos/sin precomputed outside the kernel (EUP work hoisted).
    theta = _compute_theta(pos, params).transpose(0, 2, 1, 3)   # (N, nh, S, rot)
    cos_t = jnp.cos(theta).astype(jnp.float32)
    sin_t = jnp.sin(theta).astype(jnp.float32)
    sqrt_scale = jnp.sqrt(params['attn_scale']).reshape(nh, 1, 1).astype(jnp.float32)

    # ---- stage 2: flash attention --------------------------------------------
    n_kv_passes = S // bq
    attn_h = pl.pallas_call(
        functools.partial(_flash_attn_kernel, rot=rot, eps=_EPS, compute_dtype=cdt),
        out_shape=jax.ShapeDtypeStruct((N, nh, S, dh), cdt),
        grid=(N, S // bq, S // bkv),
        in_specs=[
            pl.BlockSpec((nh, 1, 1), lambda b, qi, ki: (0, 0, 0)),
            pl.BlockSpec((1, nh, bq, dh), lambda b, qi, ki: (b, 0, qi, 0)),
            pl.BlockSpec((1, nh, bkv, dh), lambda b, qi, ki: (b, 0, ki, 0)),
            pl.BlockSpec((1, nh, bkv, dh), lambda b, qi, ki: (b, 0, ki, 0)),
            pl.BlockSpec((1, nh, bq, rot), lambda b, qi, ki: (b, 0, qi, 0)),
            pl.BlockSpec((1, nh, bq, rot), lambda b, qi, ki: (b, 0, qi, 0)),
            pl.BlockSpec((1, nh, bkv, rot), lambda b, qi, ki: (b, 0, ki, 0)),
            pl.BlockSpec((1, nh, bkv, rot), lambda b, qi, ki: (b, 0, ki, 0)),
        ],
        out_specs=pl.BlockSpec((1, nh, bq, dh), lambda b, qi, ki: (b, 0, qi, 0)),
        scratch_shapes=[
            pltpu.VMEM((nh, bq, dh), cdt),           # prepped Q (cached over kv)
            pltpu.VMEM((nh, bq, 1), jnp.float32),    # running max
            pltpu.VMEM((nh, bq, 1), jnp.float32),    # running denom
            pltpu.VMEM((nh, bq, dh), jnp.float32),   # accumulator
        ],
        compiler_params=pltpu.CompilerParams(
            dimension_semantics=("parallel", "parallel", "arbitrary"),
            vmem_limit_bytes=_VMEM_LIMIT_BYTES),
        cost_estimate=pl.CostEstimate(
            flops=4 * N * nh * S * S * dh,
            transcendentals=N * nh * S * S,
            bytes_accessed=N * S * D * isz * (2 + 2 * n_kv_passes)
                           + 2 * N * nh * S * rot * 4 * (1 + n_kv_passes)),
    )(sqrt_scale, qh, kh, vh, cos_t, sin_t, cos_t, sin_t)

    attn = attn_h.transpose(0, 2, 1, 3).reshape(N, S, D)   # back to (N, S, D)

    # ---- stage 3: out-proj + residual + AdaRMSNorm + GEGLU FF + residual -----
    out = pl.pallas_call(
        functools.partial(_out_ff_kernel, eps=_EPS, compute_dtype=cdt),
        out_shape=jax.ShapeDtypeStruct((N, S, D), x.dtype),
        grid=(N, S // br),
        in_specs=[
            pl.BlockSpec((1, br, D), lambda b, s: (b, s, 0)),   # attention out
            pl.BlockSpec((1, br, D), lambda b, s: (b, s, 0)),   # skip (x)
            pl.BlockSpec((1, 1, CF), lambda b, s: (b, 0, 0)),
            pl.BlockSpec((D, D), lambda b, s: (0, 0)),          # w_out
            pl.BlockSpec((CF, D), lambda b, s: (0, 0)),         # w_norm_ff
            pl.BlockSpec((D, d_ff), lambda b, s: (0, 0)),       # w_up (value)
            pl.BlockSpec((D, d_ff), lambda b, s: (0, 0)),       # w_up (gate)
            pl.BlockSpec((d_ff, D), lambda b, s: (0, 0)),       # w_down
        ],
        out_specs=pl.BlockSpec((1, br, D), lambda b, s: (b, s, 0)),
        compiler_params=sem2,
        cost_estimate=pl.CostEstimate(
            flops=2 * N * S * D * D + 4 * N * S * D * d_ff + 2 * N * S * d_ff * D,
            transcendentals=N * S * d_ff,
            bytes_accessed=N * S * D * (2 * 4 + isz) + (D * D + 3 * D * d_ff) * isz),
    )(attn, x_flat, cond3,
      params['w_out'].astype(cdt),
      params['w_norm_ff'].astype(jnp.float32),
      params['w_up'][:, :d_ff].astype(cdt),
      params['w_up'][:, d_ff:].astype(cdt),
      params['w_down'].astype(cdt))

    return out.reshape(N, H, W, D)


# ----------------------------------------------------------------------------
# pure-JAX reference (for validation)
# ----------------------------------------------------------------------------
def _rms_norm(x, scale, eps=1e-6):
    mean_sq = jnp.mean(x * x, axis=-1, keepdims=True)
    return x * (jax.lax.rsqrt(mean_sq + eps) * scale)


def reference_forward(x, pos, cond, params):
    hp = jax.lax.Precision.HIGHEST
    N, H, W, D = x.shape
    S = H * W
    nh, dh = params['n_heads'], params['d_head']
    rot = dh // 4

    # --- SelfAttentionBlock ---
    skip = x
    ada = jnp.dot(cond, params['w_norm_attn'], precision=hp) + 1.0
    xn = _rms_norm(x, ada[:, None, None, :])
    qkv = jnp.dot(xn.reshape(N, S, D), params['w_qkv'], precision=hp)
    qkv = qkv.reshape(N, S, 3, nh, dh)
    q = jnp.transpose(qkv[:, :, 0], (0, 2, 1, 3))
    k = jnp.transpose(qkv[:, :, 1], (0, 2, 1, 3))
    v = jnp.transpose(qkv[:, :, 2], (0, 2, 1, 3))
    scale = params['attn_scale'][None, :, None, None]
    q = q * (jnp.sqrt(scale) * jax.lax.rsqrt(jnp.sum(q * q, -1, keepdims=True) + 1e-6))
    k = k * (jnp.sqrt(scale) * jax.lax.rsqrt(jnp.sum(k * k, -1, keepdims=True) + 1e-6))
    theta = jnp.transpose(_compute_theta(pos, params), (0, 2, 1, 3))
    c, s = jnp.cos(theta), jnp.sin(theta)

    def rope(z):
        z1, z2, z3 = z[..., :rot], z[..., rot:2 * rot], z[..., 2 * rot:]
        return jnp.concatenate([z1 * c - z2 * s, z2 * c + z1 * s, z3], axis=-1)

    q, k = rope(q), rope(k)
    att = jnp.einsum('nhqe,nhke->nhqk', q, k, precision=hp)
    p = jax.nn.softmax(att, axis=-1)
    o = jnp.einsum('nhqk,nhke->nhqe', p, v, precision=hp)
    o = jnp.transpose(o, (0, 2, 1, 3)).reshape(N, H, W, D)
    x = jnp.dot(o, params['w_out'], precision=hp) + skip

    # --- FeedForwardBlock ---
    skip = x
    ada = jnp.dot(cond, params['w_norm_ff'], precision=hp) + 1.0
    xn = _rms_norm(x, ada[:, None, None, :])
    u = jnp.dot(xn, params['w_up'], precision=hp)
    a, g = u[..., :params['d_ff']], u[..., params['d_ff']:]
    hidden = a * jax.nn.gelu(g, approximate=False)
    y = jnp.dot(hidden, params['w_down'], precision=hp)
    return y + skip


# ----------------------------------------------------------------------------
if __name__ == "__main__":
    N, H, W = 2, 8, 8
    d_model, d_ff, d_head, cond_features = 32, 64, 16, 16

    key = jax.random.PRNGKey(0)
    k_x, k_c, k_p = jax.random.split(key, 3)
    params = init_params(k_p, d_model, d_ff, d_head, cond_features)

    x = jax.random.normal(k_x, (N, H, W, d_model), jnp.float32)
    cond = jax.random.normal(k_c, (N, cond_features), jnp.float32)
    ys, xs = jnp.meshgrid(jnp.arange(H, dtype=jnp.float32),
                          jnp.arange(W, dtype=jnp.float32), indexing='ij')
    pos = jnp.stack([ys / H, xs / W], axis=-1)             # (H, W, 2)
    pos = jnp.broadcast_to(pos[None], (N, H, W, 2))

    ref = jax.block_until_ready(reference_forward(x, pos, cond, params))

    # f32 compute path: element-wise check against the f32 reference
    # (tolerance covers MXU rounding + tanh-GELU vs erf-GELU, ~5e-4 abs).
    out_f32 = jax.block_until_ready(
        global_transformer_layer(x, pos, cond, params, compute_dtype=jnp.float32))
    np.testing.assert_allclose(np.asarray(out_f32), np.asarray(ref),
                               rtol=1e-2, atol=1e-2)

    # bf16 MXU-operand path (production config): relative-Frobenius check.
    out_bf16 = jax.block_until_ready(
        global_transformer_layer(x, pos, cond, params, compute_dtype=jnp.bfloat16))
    rel = (np.linalg.norm(np.asarray(out_bf16, np.float32) - np.asarray(ref))
           / np.linalg.norm(np.asarray(ref)))
    assert rel < 5e-2, f"bf16 path relative error too large: {rel}"

    print("KERNEL_OK")
</pallas_src>

<mosaic_0001>
module attributes {stable_mosaic.version = 11 : i64} {
  func.func @_qkv_kernel(%arg0: i32, %arg1: i32, %arg2: memref<1x64x32xf32, #tpu.memory_space<vmem>>, %arg3: memref<1x1x16xf32, #tpu.memory_space<vmem>>, %arg4: memref<16x32xf32, #tpu.memory_space<vmem>>, %arg5: memref<32x32xf32, #tpu.memory_space<vmem>>, %arg6: memref<32x32xf32, #tpu.memory_space<vmem>>, %arg7: memref<32x32xf32, #tpu.memory_space<vmem>>, %arg8: memref<1x64x32xf32, #tpu.memory_space<vmem>>, %arg9: memref<1x64x32xf32, #tpu.memory_space<vmem>>, %arg10: memref<1x64x32xf32, #tpu.memory_space<vmem>>) attributes {dimension_semantics = [#tpu.dimension_semantics<parallel>, #tpu.dimension_semantics<parallel>], iteration_bounds = array<i64: 2, 1>, scalar_prefetch = 0 : i64, scratch_operands = 0 : i64, tpu.core_type = #tpu.core_type<tc>, window_params = [{transform_indices = @transform_0, window_bounds = array<i64: 1, 64, 32>}, {transform_indices = @transform_1, window_bounds = array<i64: 1, 1, 16>}, {pipeline_mode = #tpu.pipeline_mode<synchronous>, transform_indices = @transform_2, window_bounds = array<i64: 16, 32>}, {pipeline_mode = #tpu.pipeline_mode<synchronous>, transform_indices = @transform_3, window_bounds = array<i64: 32, 32>}, {pipeline_mode = #tpu.pipeline_mode<synchronous>, transform_indices = @transform_4, window_bounds = array<i64: 32, 32>}, {pipeline_mode = #tpu.pipeline_mode<synchronous>, transform_indices = @transform_5, window_bounds = array<i64: 32, 32>}, {transform_indices = @transform_6, window_bounds = array<i64: 1, 64, 32>}, {transform_indices = @transform_7, window_bounds = array<i64: 1, 64, 32>}, {transform_indices = @transform_8, window_bounds = array<i64: 1, 64, 32>}]} {
    %c0 = arith.constant 0 : index
    %c0_0 = arith.constant 0 : index
    %c0_1 = arith.constant 0 : index
    %0 = vector.load %arg2[%c0, %c0_0, %c0_1] : memref<1x64x32xf32, #tpu.memory_space<vmem>>, vector<1x64x32xf32>
    %1 = vector.shape_cast %0 : vector<1x64x32xf32> to vector<64x32xf32>
    %c0_2 = arith.constant 0 : index
    %c0_3 = arith.constant 0 : index
    %c0_4 = arith.constant 0 : index
    %2 = vector.load %arg3[%c0_2, %c0_3, %c0_4] : memref<1x1x16xf32, #tpu.memory_space<vmem>>, vector<1x1x16xf32>
    %3 = vector.shape_cast %2 : vector<1x1x16xf32> to vector<1x16xf32>
    %c0_5 = arith.constant 0 : index
    %c0_6 = arith.constant 0 : index
    %4 = vector.load %arg4[%c0_5, %c0_6] : memref<16x32xf32, #tpu.memory_space<vmem>>, vector<16x32xf32>
    %cst = arith.constant dense<0.000000e+00> : vector<1x32xf32>
    %5 = tpu.matmul %3, %4, %cst {dimension_numbers = #tpu.dot_dimension_numbers<[1], [0], [0], [1], [0, 0, 1, 1], [], []>} : vector<1x16xf32>, vector<16x32xf32>, vector<1x32xf32> -> vector<1x32xf32>
    %cst_7 = arith.constant 1.000000e+00 : f32
    %6 = vector.broadcast %cst_7 : f32 to vector<1x32xf32>
    %7 = arith.addf %5, %6 : vector<1x32xf32>
    %8 = arith.mulf %1, %1 : vector<64x32xf32>
    %cst_8 = arith.constant dense<0.000000e+00> : vector<64xf32>
    %9 = vector.multi_reduction <add>, %8, %cst_8 [1] : vector<64x32xf32> to vector<64xf32>
    %10 = vector.shape_cast %9 : vector<64xf32> to vector<64x1xf32>
    %cst_9 = arith.constant 3.200000e+01 : f32
    %11 = vector.broadcast %cst_9 : f32 to vector<64x1xf32>
    %12 = arith.divf %10, %11 : vector<64x1xf32>
    %cst_10 = arith.constant 9.99999997E-7 : f32
    %13 = vector.broadcast %cst_10 : f32 to vector<64x1xf32>
    %14 = arith.addf %12, %13 : vector<64x1xf32>
    %15 = math.rsqrt %14 : vector<64x1xf32>
    %16 = vector.broadcast %15 : vector<64x1xf32> to vector<64x32xf32>
    %17 = vector.broadcast %7 : vector<1x32xf32> to vector<64x32xf32>
    %18 = arith.mulf %16, %17 : vector<64x32xf32>
    %19 = arith.mulf %1, %18 : vector<64x32xf32>
    %c0_11 = arith.constant 0 : index
    %c0_12 = arith.constant 0 : index
    %20 = vector.load %arg5[%c0_11, %c0_12] : memref<32x32xf32, #tpu.memory_space<vmem>>, vector<32x32xf32>
    %cst_13 = arith.constant dense<0.000000e+00> : vector<64x32xf32>
    %21 = tpu.matmul %19, %20, %cst_13 {dimension_numbers = #tpu.dot_dimension_numbers<[1], [0], [0], [1], [0, 0, 1, 1], [], []>} : vector<64x32xf32>, vector<32x32xf32>, vector<64x32xf32> -> vector<64x32xf32>
    %c0_14 = arith.constant 0 : index
    %c0_15 = arith.constant 0 : index
    %c0_16 = arith.constant 0 : index
    %22 = vector.load %arg8[%c0_14, %c0_15, %c0_16] : memref<1x64x32xf32, #tpu.memory_space<vmem>>, vector<1x64x32xf32>
    %23 = vector.shape_cast %22 : vector<1x64x32xf32> to vector<64x32xf32>
    %24 = vector.shape_cast %21 : vector<64x32xf32> to vector<1x64x32xf32>
    tpu.vector_store %arg8[%c0_14, %c0_15, %c0_16], %24 {strides = array<i32>} : memref<1x64x32xf32, #tpu.memory_space<vmem>>, vector<1x64x32xf32>,
    %c0_17 = arith.constant 0 : index
    %c0_18 = arith.constant 0 : index
    %25 = vector.load %arg6[%c0_17, %c0_18] : memref<32x32xf32, #tpu.memory_space<vmem>>, vector<32x32xf32>
    %cst_19 = arith.constant dense<0.000000e+00> : vector<64x32xf32>
    %26 = tpu.matmul %19, %25, %cst_19 {dimension_numbers = #tpu.dot_dimension_numbers<[1], [0], [0], [1], [0, 0, 1, 1], [], []>} : vector<64x32xf32>, vector<32x32xf32>, vector<64x32xf32> -> vector<64x32xf32>
    %c0_20 = arith.constant 0 : index
    %c0_21 = arith.constant 0 : index
    %c0_22 = arith.constant 0 : index
    %27 = vector.load %arg9[%c0_20, %c0_21, %c0_22] : memref<1x64x32xf32, #tpu.memory_space<vmem>>, vector<1x64x32xf32>
    %28 = vector.shape_cast %27 : vector<1x64x32xf32> to vector<64x32xf32>
    %29 = vector.shape_cast %26 : vector<64x32xf32> to vector<1x64x32xf32>
    tpu.vector_store %arg9[%c0_20, %c0_21, %c0_22], %29 {strides = array<i32>} : memref<1x64x32xf32, #tpu.memory_space<vmem>>, vector<1x64x32xf32>,
    %c0_23 = arith.constant 0 : index
    %c0_24 = arith.constant 0 : index
    %30 = vector.load %arg7[%c0_23, %c0_24] : memref<32x32xf32, #tpu.memory_space<vmem>>, vector<32x32xf32>
    %cst_25 = arith.constant dense<0.000000e+00> : vector<64x32xf32>
    %31 = tpu.matmul %19, %30, %cst_25 {dimension_numbers = #tpu.dot_dimension_numbers<[1], [0], [0], [1], [0, 0, 1, 1], [], []>} : vector<64x32xf32>, vector<32x32xf32>, vector<64x32xf32> -> vector<64x32xf32>
    %c0_26 = arith.constant 0 : index
    %c0_27 = arith.constant 0 : index
    %c0_28 = arith.constant 0 : index
    %32 = vector.load %arg10[%c0_26, %c0_27, %c0_28] : memref<1x64x32xf32, #tpu.memory_space<vmem>>, vector<1x64x32xf32>
    %33 = vector.shape_cast %32 : vector<1x64x32xf32> to vector<64x32xf32>
    %34 = vector.shape_cast %31 : vector<64x32xf32> to vector<1x64x32xf32>
    tpu.vector_store %arg10[%c0_26, %c0_27, %c0_28], %34 {strides = array<i32>} : memref<1x64x32xf32, #tpu.memory_space<vmem>>, vector<1x64x32xf32>,
    return
  }
  func.func @transform_0(%arg0: i32, %arg1: i32) -> (i32, i32, i32) {
    %c0_i32 = arith.constant 0 : i32
    %c0_i32_0 = arith.constant 0 : i32
    return %arg0, %arg1, %c0_i32 : i32, i32, i32
  }
  func.func @transform_1(%arg0: i32, %arg1: i32) -> (i32, i32, i32) {
    %c0_i32 = arith.constant 0 : i32
    %c0_i32_0 = arith.constant 0 : i32
    %c0_i32_1 = arith.constant 0 : i32
    return %arg0, %c0_i32, %c0_i32_0 : i32, i32, i32
  }
  func.func @transform_2(%arg0: i32, %arg1: i32) -> (i32, i32) {
    %c0_i32 = arith.constant 0 : i32
    %c0_i32_0 = arith.constant 0 : i32
    %c0_i32_1 = arith.constant 0 : i32
    return %c0_i32, %c0_i32_0 : i32, i32
  }
  func.func @transform_3(%arg0: i32, %arg1: i32) -> (i32, i32) {
    %c0_i32 = arith.constant 0 : i32
    %c0_i32_0 = arith.constant 0 : i32
    %c0_i32_1 = arith.constant 0 : i32
    return %c0_i32, %c0_i32_0 : i32, i32
  }
  func.func @transform_4(%arg0: i32, %arg1: i32) -> (i32, i32) {
    %c0_i32 = arith.constant 0 : i32
    %c0_i32_0 = arith.constant 0 : i32
    %c0_i32_1 = arith.constant 0 : i32
    return %c0_i32, %c0_i32_0 : i32, i32
  }
  func.func @transform_5(%arg0: i32, %arg1: i32) -> (i32, i32) {
    %c0_i32 = arith.constant 0 : i32
    %c0_i32_0 = arith.constant 0 : i32
    %c0_i32_1 = arith.constant 0 : i32
    return %c0_i32, %c0_i32_0 : i32, i32
  }
  func.func @transform_6(%arg0: i32, %arg1: i32) -> (i32, i32, i32) {
    %c0_i32 = arith.constant 0 : i32
    %c0_i32_0 = arith.constant 0 : i32
    return %arg0, %arg1, %c0_i32 : i32, i32, i32
  }
  func.func @transform_7(%arg0: i32, %arg1: i32) -> (i32, i32, i32) {
    %c0_i32 = arith.constant 0 : i32
    %c0_i32_0 = arith.constant 0 : i32
    return %arg0, %arg1, %c0_i32 : i32, i32, i32
  }
  func.func @transform_8(%arg0: i32, %arg1: i32) -> (i32, i32, i32) {
    %c0_i32 = arith.constant 0 : i32
    %c0_i32_0 = arith.constant 0 : i32
    return %arg0, %arg1, %c0_i32 : i32, i32, i32
  }
}

</mosaic_0001>

<llo_original>
// kernel: tpu_custom_call.1
$region0: #{tpu_custom_call.1}
  #allocation0 [shape = 'u32[]', space=smem, size = 0x4, offset = 0x4, fixed_abs, tag = 'smem constant byte address 0x4 - core index']
  #allocation1 [shape = 'u32[144,128]{1,0:T(1,128)}', space=vmem, size = 0x12000, scoped, tag = 'internal scratch']
  %s0 = inlined_call_operand.vmem [shape: f32[2,64,32], index: 0, kind: input, shape index: {}]
  %s1 = inlined_call_operand.vmem [shape: f32[2,1,16], index: 1, kind: input, shape index: {}]
  %s2 = inlined_call_operand.vmem [shape: f32[16,32], index: 2, kind: input, shape index: {}]
  %s3 = inlined_call_operand.vmem [shape: f32[32,32], index: 3, kind: input, shape index: {}]
  %s4 = inlined_call_operand.vmem [shape: f32[32,32], index: 4, kind: input, shape index: {}]
  %s5 = inlined_call_operand.vmem [shape: f32[32,32], index: 5, kind: input, shape index: {}]
  %s6 = inlined_call_operand.vmem [shape: f32[2,64,32], index: 6, kind: output, shape index: {0}]
  %s7 = inlined_call_operand.vmem [shape: f32[2,64,32], index: 7, kind: output, shape index: {1}]
  %s8 = inlined_call_operand.vmem [shape: f32[2,64,32], index: 8, kind: output, shape index: {2}]
  %9 = xla_tuple %s6, %s7, %s8
  %s10 = sld [smem:[#allocation0]]
  $region73: #{tpu_custom_call.1} parent=0
    _
  %s12 = ssub.s32 1, %s10
  %s13 = scalar_select 0, %s12, %s10
  loop: start=0, step=1, limit=4
  $region2: #{tpu_custom_call.1} parent=0 // loop_pre_header
    _
  $region3: #{tpu_custom_call.1} parent=0 // loop_header
    %s15 = sphi 0, %s19
    %p16 = scmp.ge.s32.totalorder %s15, 4
    %s22 = sphi 0, %s34
    %s23 = sphi 0, %s30
    %s24 = sphi 0, %s22
    %s25 = sphi 0, %s23
    %s26 = sphi 0, %s24
    %s27 = sphi 0, %s25
    %s39 = sphi 0, %s41
    %s42 = sphi 0, %s39
    %s43 = sphi 0, %s42
    %s59 = sphi 0, %s43
    %s65 = sphi 0, %s67
    %s68 = sphi 0, %s65
    %s69 = sphi 0, %s68
    %s85 = sphi 0, %s69
    %s89 = sphi 0, %s89
    %s91 = sphi 0, %s89
    %s92 = sphi 0, %s91
    %s106 = sphi 0, %s92
    %s110 = sphi 0, %s110
    %s112 = sphi 0, %s110
    %s113 = sphi 0, %s112
    %s127 = sphi 0, %s113
    %s131 = sphi 0, %s131
    %s133 = sphi 0, %s131
    %s134 = sphi 0, %s133
    %s148 = sphi 0, %s134
    %s152 = sphi 0, %s152
    %s154 = sphi 0, %s152
    %s155 = sphi 0, %s154
    %s169 = sphi 0, %s155
    %s177 = sphi 0, %s179
    %s180 = sphi 0, %s177
    %s181 = sphi 0, %s180
    %s197 = sphi 0, %s181
    %s205 = sphi 0, %s207
    %s208 = sphi 0, %s205
    %s209 = sphi 0, %s208
    %s225 = sphi 0, %s209
    %s233 = sphi 0, %s235
    %s236 = sphi 0, %s233
    %s237 = sphi 0, %s236
    %s253 = sphi 0, %s237
  $region4: #{tpu_custom_call.1} parent=0 // loop_header_branch
    %18 = sbr.rel (%p16) target = $region8
  $region5: #{tpu_custom_call.1} parent=0 // loop_body
    %s20 = ssub.s32 %s15, 1
    %s21 = ssub.s32 %s15, 2
    %s28 = sadd.s32 1, %s23
    %p29 = scmp.ge.s32.totalorder %s28, 1
    %s30 = scalar_select %p29, 0, %s28
    %s31 = sadd.s32 1, %s22
    %s32 = scalar_select %p29, %s31, %s22
    %p33 = scmp.ge.s32.totalorder %s32, 2
    %s34 = scalar_select %p33, 0, %s32
    %s35 = ssub.s32 %s22, %s34
    %s36 = ssub.s32 %s23, %s30
    %s37 = sor.u32 %s35, %s36
    %p38 = scmp.eq.s32.totalorder %s37, 0
    %s40 = sadd.s32 %s39, 1
    %s41 = scalar_select %p38, %s39, %s40
    %p44 = pneg %p38
    %p45 = scmp.eq.s32.totalorder %s15, 1
    %p46 = por %p44, %p45
    %p47 = scmp.ne.s32.totalorder %s39, %s42
    %p48 = scmp.eq.s32.totalorder %s15, 0
    %p49 = por %p47, %p48
    %p50 = scmp.ne.s32.totalorder %s39, %s42
    %p51 = scmp.eq.s32.totalorder %s20, 1
    %p52 = por %p50, %p51
    %p53 = scmp.ne.s32.totalorder %s42, %s43
    %p54 = scmp.eq.s32.totalorder %s20, 0
    %p55 = por %p53, %p54
    %p56 = scmp.ne.s32.totalorder %s42, %s43
    %p57 = scmp.eq.s32.totalorder %s21, 1
    %p58 = por %p56, %p57
    %p60 = scmp.ne.s32.totalorder %s43, %s59
    %p61 = scmp.eq.s32.totalorder %s21, 0
    %p62 = por %p60, %p61
    %s63 = ssub.s32 %s22, %s34
    %p64 = scmp.eq.s32.totalorder %s63, 0
    %s66 = sadd.s32 %s65, 1
    %s67 = scalar_select %p64, %s65, %s66
    %p70 = pneg %p64
    %p71 = scmp.eq.s32.totalorder %s15, 1
    %p72 = por %p70, %p71
    %p73 = scmp.ne.s32.totalorder %s65, %s68
    %p74 = scmp.eq.s32.totalorder %s15, 0
    %p75 = por %p73, %p74
    %p76 = scmp.ne.s32.totalorder %s65, %s68
    %p77 = scmp.eq.s32.totalorder %s20, 1
    %p78 = por %p76, %p77
    %p79 = scmp.ne.s32.totalorder %s68, %s69
    %p80 = scmp.eq.s32.totalorder %s20, 0
    %p81 = por %p79, %p80
    %p82 = scmp.ne.s32.totalorder %s68, %s69
    %p83 = scmp.eq.s32.totalorder %s21, 1
    %p84 = por %p82, %p83
    %p86 = scmp.ne.s32.totalorder %s69, %s85
    %p87 = scmp.eq.s32.totalorder %s21, 0
    %p88 = por %p86, %p87
    %s90 = sadd.s32 %s89, 1
    %p93 = scmp.eq.s32.totalorder %s15, 1
    %p94 = scmp.ne.s32.totalorder %s89, %s91
    %p95 = scmp.eq.s32.totalorder %s15, 0
    %p96 = por %p94, %p95
    %p97 = scmp.ne.s32.totalorder %s89, %s91
    %p98 = scmp.eq.s32.totalorder %s20, 1
    %p99 = por %p97, %p98
    %p100 = scmp.ne.s32.totalorder %s91, %s92
    %p101 = scmp.eq.s32.totalorder %s20, 0
    %p102 = por %p100, %p101
    %p103 = scmp.ne.s32.totalorder %s91, %s92
    %p104 = scmp.eq.s32.totalorder %s21, 1
    %p105 = por %p103, %p104
    %p107 = scmp.ne.s32.totalorder %s92, %s106
    %p108 = scmp.eq.s32.totalorder %s21, 0
    %p109 = por %p107, %p108
    %s111 = sadd.s32 %s110, 1
    %p114 = scmp.eq.s32.totalorder %s15, 1
    %p115 = scmp.ne.s32.totalorder %s110, %s112
    %p116 = scmp.eq.s32.totalorder %s15, 0
    %p117 = por %p115, %p116
    %p118 = scmp.ne.s32.totalorder %s110, %s112
    %p119 = scmp.eq.s32.totalorder %s20, 1
    %p120 = por %p118, %p119
    %p121 = scmp.ne.s32.totalorder %s112, %s113
    %p122 = scmp.eq.s32.totalorder %s20, 0
    %p123 = por %p121, %p122
    %p124 = scmp.ne.s32.totalorder %s112, %s113
    %p125 = scmp.eq.s32.totalorder %s21, 1
    %p126 = por %p124, %p125
    %p128 = scmp.ne.s32.totalorder %s113, %s127
    %p129 = scmp.eq.s32.totalorder %s21, 0
    %p130 = por %p128, %p129
    %s132 = sadd.s32 %s131, 1
    %p135 = scmp.eq.s32.totalorder %s15, 1
    %p136 = scmp.ne.s32.totalorder %s131, %s133
    %p137 = scmp.eq.s32.totalorder %s15, 0
    %p138 = por %p136, %p137
    %p139 = scmp.ne.s32.totalorder %s131, %s133
    %p140 = scmp.eq.s32.totalorder %s20, 1
    %p141 = por %p139, %p140
    %p142 = scmp.ne.s32.totalorder %s133, %s134
    %p143 = scmp.eq.s32.totalorder %s20, 0
    %p144 = por %p142, %p143
    %p145 = scmp.ne.s32.totalorder %s133, %s134
    %p146 = scmp.eq.s32.totalorder %s21, 1
    %p147 = por %p145, %p146
    %p149 = scmp.ne.s32.totalorder %s134, %s148
    %p150 = scmp.eq.s32.totalorder %s21, 0
    %p151 = por %p149, %p150
    %s153 = sadd.s32 %s152, 1
    %p156 = scmp.eq.s32.totalorder %s15, 1
    %p157 = scmp.ne.s32.totalorder %s152, %s154
    %p158 = scmp.eq.s32.totalorder %s15, 0
    %p159 = por %p157, %p158
    %p160 = scmp.ne.s32.totalorder %s152, %s154
    %p161 = scmp.eq.s32.totalorder %s20, 1
    %p162 = por %p160, %p161
    %p163 = scmp.ne.s32.totalorder %s154, %s155
    %p164 = scmp.eq.s32.totalorder %s20, 0
    %p165 = por %p163, %p164
    %p166 = scmp.ne.s32.totalorder %s154, %s155
    %p167 = scmp.eq.s32.totalorder %s21, 1
    %p168 = por %p166, %p167
    %p170 = scmp.ne.s32.totalorder %s155, %s169
    %p171 = scmp.eq.s32.totalorder %s21, 0
    %p172 = por %p170, %p171
    %s173 = ssub.s32 %s22, %s34
    %s174 = ssub.s32 %s23, %s30
    %s175 = sor.u32 %s173, %s174
    %p176 = scmp.eq.s32.totalorder %s175, 0
    %s178 = sadd.s32 %s177, 1
    %s179 = scalar_select %p176, %s177, %s178
    %p182 = pneg %p176
    %p183 = scmp.eq.s32.totalorder %s15, 1
    %p184 = por %p182, %p183
    %p185 = scmp.ne.s32.totalorder %s177, %s180
    %p186 = scmp.eq.s32.totalorder %s15, 0
    %p187 = por %p185, %p186
    %p188 = scmp.ne.s32.totalorder %s177, %s180
    %p189 = scmp.eq.s32.totalorder %s20, 1
    %p190 = por %p188, %p189
    %p191 = scmp.ne.s32.totalorder %s180, %s181
    %p192 = scmp.eq.s32.totalorder %s20, 0
    %p193 = por %p191, %p192
    %p194 = scmp.ne.s32.totalorder %s180, %s181
    %p195 = scmp.eq.s32.totalorder %s21, 1
    %p196 = por %p194, %p195
    %p198 = scmp.ne.s32.totalorder %s181, %s197
    %p199 = scmp.eq.s32.totalorder %s21, 0
    %p200 = por %p198, %p199
    %s201 = ssub.s32 %s22, %s34
    %s202 = ssub.s32 %s23, %s30
    %s203 = sor.u32 %s201, %s202
    %p204 = scmp.eq.s32.totalorder %s203, 0
    %s206 = sadd.s32 %s205, 1
    %s207 = scalar_select %p204, %s205, %s206
    %p210 = pneg %p204
    %p211 = scmp.eq.s32.totalorder %s15, 1
    %p212 = por %p210, %p211
    %p213 = scmp.ne.s32.totalorder %s205, %s208
    %p214 = scmp.eq.s32.totalorder %s15, 0
    %p215 = por %p213, %p214
    %p216 = scmp.ne.s32.totalorder %s205, %s208
    %p217 = scmp.eq.s32.totalorder %s20, 1
    %p218 = por %p216, %p217
    %p219 = scmp.ne.s32.totalorder %s208, %s209
    %p220 = scmp.eq.s32.totalorder %s20, 0
    %p221 = por %p219, %p220
    %p222 = scmp.ne.s32.totalorder %s208, %s209
    %p223 = scmp.eq.s32.totalorder %s21, 1
    %p224 = por %p222, %p223
    %p226 = scmp.ne.s32.totalorder %s209, %s225
    %p227 = scmp.eq.s32.totalorder %s21, 0
    %p228 = por %p226, %p227
    %s229 = ssub.s32 %s22, %s34
    %s230 = ssub.s32 %s23, %s30
    %s231 = sor.u32 %s229, %s230
    %p232 = scmp.eq.s32.totalorder %s231, 0
    %s234 = sadd.s32 %s233, 1
    %s235 = scalar_select %p232, %s233, %s234
    %p238 = pneg %p232
    %p239 = scmp.eq.s32.totalorder %s15, 1
    %p240 = por %p238, %p239
    %p241 = scmp.ne.s32.totalorder %s233, %s236
    %p242 = scmp.eq.s32.totalorder %s15, 0
    %p243 = por %p241, %p242
    %p244 = scmp.ne.s32.totalorder %s233, %s236
    %p245 = scmp.eq.s32.totalorder %s20, 1
    %p246 = por %p244, %p245
    %p247 = scmp.ne.s32.totalorder %s236, %s237
    %p248 = scmp.eq.s32.totalorder %s20, 0
    %p249 = por %p247, %p248
    %p250 = scmp.ne.s32.totalorder %s236, %s237
    %p251 = scmp.eq.s32.totalorder %s21, 1
    %p252 = por %p250, %p251
    %p254 = scmp.ne.s32.totalorder %s237, %s253
    %p255 = scmp.eq.s32.totalorder %s21, 0
    %p256 = por %p254, %p255
    %p257 = scmp.le.s32.totalorder 1, %s15
    %p258 = scmp.lt.s32.totalorder %s15, 3
    %p259 = pnand %p257, %p258
    %p260 = pneg %p259
    // Predicated region
    $region9: #{tpu_custom_call.1} parent=5 // pred_check
      _
    $region10: #{tpu_custom_call.1} parent=5 // pred_check_branch
      %262 = sbr.rel (%p259) target = $region12
    $region11: #{tpu_custom_call.1} parent=5 // pred_region
      %s263 = ssub.s32 %s15, 1
      // Predicated region
      $region13: #{tpu_custom_call.1} parent=11 // pred_check
        %p264 = pneg %p102
      $region14: #{tpu_custom_call.1} parent=11 // pred_check_branch
        %266 = sbr.rel (%p264) target = $region16
      $region15: #{tpu_custom_call.1} parent=11 // pred_region
        _
      $region16: #{tpu_custom_call.1} parent=11 // pred_fallthru
        _
      // Predicated region
      $region17: #{tpu_custom_call.1} parent=11 // pred_check
        %p267 = pneg %p123
      $region18: #{tpu_custom_call.1} parent=11 // pred_check_branch
        %269 = sbr.rel (%p267) target = $region20
      $region19: #{tpu_custom_call.1} parent=11 // pred_region
        _
      $region20: #{tpu_custom_call.1} parent=11 // pred_fallthru
        _
      // Predicated region
      $region21: #{tpu_custom_call.1} parent=11 // pred_check
        %p270 = pneg %p144
      $region22: #{tpu_custom_call.1} parent=11 // pred_check_branch
        %272 = sbr.rel (%p270) target = $region24
      $region23: #{tpu_custom_call.1} parent=11 // pred_region
        _
      $region24: #{tpu_custom_call.1} parent=11 // pred_fallthru
        _
      // Predicated region
      $region25: #{tpu_custom_call.1} parent=11 // pred_check
        %p273 = pneg %p165
      $region26: #{tpu_custom_call.1} parent=11 // pred_check_branch
        %275 = sbr.rel (%p273) target = $region28
      $region27: #{tpu_custom_call.1} parent=11 // pred_region
        _
      $region28: #{tpu_custom_call.1} parent=11 // pred_fallthru
        _
    $region12: #{tpu_custom_call.1} parent=5 // pred_fallthru
      _
    %p276 = scmp.lt.s32.totalorder %s15, 2
    // Predicated region
    $region29: #{tpu_custom_call.1} parent=5 // pred_check
      %p277 = pneg %p276
    $region30: #{tpu_custom_call.1} parent=5 // pred_check_branch
      %279 = sbr.rel (%p277) target = $region32
    $region31: #{tpu_custom_call.1} parent=5 // pred_region
      // Predicated region
      $region33: #{tpu_custom_call.1} parent=31 // pred_check
        %p280 = pneg %p49
      $region34: #{tpu_custom_call.1} parent=31 // pred_check_branch
        %282 = sbr.rel (%p280) target = $region36
      $region35: #{tpu_custom_call.1} parent=31 // pred_region
        %s283 = smul.u32 8, %s23
        %p284 = scmp.lt.s32.totalorder %s22, 1
        %s285 = scalar_select %p284, %s22, 1
        %p286 = scmp.lt.s32.totalorder %s283, 7
        %s287 = scalar_select %p286, %s283, 7
        %s288 = smul.addr %s285, 8
        %s289 = sadd.s32 %s287, %s288
        %s290 = smul.addr %s289, 8
        %s291 = scalar_lea.vmem %s0, %s290
        %s292 = smul.u32 8, %s23
      $region36: #{tpu_custom_call.1} parent=31 // pred_fallthru
        _
      // Predicated region
      $region37: #{tpu_custom_call.1} parent=31 // pred_check
        %p293 = pneg %p75
      $region38: #{tpu_custom_call.1} parent=31 // pred_check_branch
        %295 = sbr.rel (%p293) target = $region40
      $region39: #{tpu_custom_call.1} parent=31 // pred_region
        %p296 = scmp.lt.s32.totalorder %s22, 1
        %s297 = scalar_select %p296, %s22, 1
        %s298 = scalar_lea.vmem %s1, %s297
      $region40: #{tpu_custom_call.1} parent=31 // pred_fallthru
        _
    $region32: #{tpu_custom_call.1} parent=5 // pred_fallthru
      _
    %p299 = scmp.le.s32.totalorder 1, %s15
    %p300 = scmp.lt.s32.totalorder %s15, 3
    %p301 = pnand %p299, %p300
    %p302 = pneg %p301
    // Predicated region
    $region41: #{tpu_custom_call.1} parent=5 // pred_check
      _
    $region42: #{tpu_custom_call.1} parent=5 // pred_check_branch
      %304 = sbr.rel (%p301) target = $region44
    $region43: #{tpu_custom_call.1} parent=5 // pred_region
      %s305 = ssub.s32 %s15, 1
      %s306 = smul.u32 8, %s25
      %p307 = scmp.lt.s32.totalorder %s24, 1
      %s308 = scalar_select %p307, %s24, 1
      %p309 = scmp.lt.s32.totalorder %s306, 7
      %s310 = scalar_select %p309, %s306, 7
      %s311 = smul.addr %s308, 8
      %s312 = sadd.s32 %s310, %s311
      %s313 = smul.addr %s312, 8
      %s314 = scalar_lea.vmem %s0, %s313
      %p315 = pneg %p55
      %p316 = pneg %p52
      %p317 = scmp.lt.s32.totalorder %s24, 1
      %s318 = scalar_select %p317, %s24, 1
      %s319 = scalar_lea.vmem %s1, %s318
      %p320 = pneg %p81
      %p321 = pneg %p78
      %p322 = pneg %p102
      %p323 = pneg %p99
      %p324 = pneg %p123
      %p325 = pneg %p120
      %p326 = pneg %p144
      %p327 = pneg %p141
      %p328 = pneg %p165
      %p329 = pneg %p162
      %p330 = pneg %p193
      %p331 = pneg %p190
      %s332 = smul.u32 8, %s25
      %p333 = scmp.lt.s32.totalorder %s24, 1
      %s334 = scalar_select %p333, %s24, 1
      %p335 = scmp.lt.s32.totalorder %s332, 7
      %s336 = scalar_select %p335, %s332, 7
      %s337 = smul.addr %s334, 8
      %s338 = sadd.s32 %s336, %s337
      %s339 = smul.addr %s338, 8
      %s340 = scalar_lea.vmem %s6, %s339
      %p341 = pneg %p221
      %p342 = pneg %p218
      %s343 = smul.u32 8, %s25
      %p344 = scmp.lt.s32.totalorder %s24, 1
      %s345 = scalar_select %p344, %s24, 1
      %p346 = scmp.lt.s32.totalorder %s343, 7
      %s347 = scalar_select %p346, %s343, 7
      %s348 = smul.addr %s345, 8
      %s349 = sadd.s32 %s347, %s348
      %s350 = smul.addr %s349, 8
      %s351 = scalar_lea.vmem %s7, %s350
      %p352 = pneg %p249
      %p353 = pneg %p246
      %s354 = smul.u32 8, %s25
      %p355 = scmp.lt.s32.totalorder %s24, 1
      %s356 = scalar_select %p355, %s24, 1
      %p357 = scmp.lt.s32.totalorder %s354, 7
      %s358 = scalar_select %p357, %s354, 7
      %s359 = smul.addr %s356, 8
      %s360 = sadd.s32 %s358, %s359
      %s361 = smul.addr %s360, 8
      %s362 = scalar_lea.vmem %s8, %s361
      %s363 = smul.u32 8, %s25
      %p364 = scmp.lt.s32.totalorder %s24, 1
      %s365 = scalar_select %p364, %s24, 1
      %p366 = scmp.lt.s32.totalorder %s363, 7
      %s367 = scalar_select %p366, %s363, 7
      %s368 = smul.addr %s365, 8
      %s369 = sadd.s32 %s367, %s368
      %s370 = smul.addr %s369, 8
      %s371 = scalar_lea.vmem %s0, %s370
      %s372 = smul.u32 8, %s25
      %p373 = scmp.lt.s32.totalorder %s24, 1
      %s374 = scalar_select %p373, %s24, 1
      %s375 = scalar_lea.vmem %s1, %s374
      %s376 = smul.u32 8, %s25
      %p377 = scmp.lt.s32.totalorder %s24, 1
      %s378 = scalar_select %p377, %s24, 1
      %p379 = scmp.lt.s32.totalorder %s376, 7
      %s380 = scalar_select %p379, %s376, 7
      %s381 = smul.addr %s378, 8
      %s382 = sadd.s32 %s380, %s381
      %s383 = smul.addr %s382, 8
      %s384 = scalar_lea.vmem %s6, %s383
      %s385 = smul.u32 8, %s25
      %s386 = smul.u32 8, %s25
      %p387 = scmp.lt.s32.totalorder %s24, 1
      %s388 = scalar_select %p387, %s24, 1
      %p389 = scmp.lt.s32.totalorder %s386, 7
      %s390 = scalar_select %p389, %s386, 7
      %s391 = smul.addr %s388, 8
      %s392 = sadd.s32 %s390, %s391
      %s393 = smul.addr %s392, 8
      %s394 = scalar_lea.vmem %s7, %s393
      %s395 = smul.u32 8, %s25
      %s396 = smul.u32 8, %s25
      %p397 = scmp.lt.s32.totalorder %s24, 1
      %s398 = scalar_select %p397, %s24, 1
      %p399 = scmp.lt.s32.totalorder %s396, 7
      %s400 = scalar_select %p399, %s396, 7
      %s401 = smul.addr %s398, 8
      %s402 = sadd.s32 %s400, %s401
      %s403 = smul.addr %s402, 8
      %s404 = scalar_lea.vmem %s8, %s403
      %s405 = smul.u32 8, %s25
      %v406 = vld [vmem:[%s371] sm:$0xff]
      %v407 = vld [vmem:[%s371 + $0x8] sm:$0xff]
      %v408 = vld [vmem:[%s371 + $0x10] sm:$0xff]
      %v409 = vld [vmem:[%s371 + $0x18] sm:$0xff]
      %v410 = vld [vmem:[%s371 + $0x20] sm:$0xff]
      %v411 = vld [vmem:[%s371 + $0x28] sm:$0xff]
      %v412 = vld [vmem:[%s371 + $0x30] sm:$0xff]
      %v413 = vld [vmem:[%s371 + $0x38] sm:$0xff]
      %v414 = vld [vmem:[%s375] sm:$0x1]
      %v415 = vld [vmem:[%s2] sm:$0xff]
      %v416 = vld [vmem:[%s2 + $0x8] sm:$0xff]
      %vm417 = vcmask 130048
      %v419 = vsel %vm417, %v414, 0
      %421 = vmatprep.subr.mxu0 0.0
      %422 = vmatpush1.msra.mxu0 %v415
      %423 = vmatprep.subr.mxu0 0.0
      %424 = vmatpush1.msra.mxu0 %v416
      %425 = vmatprep.subr.mxu0 0.0
      %426 = vmatpush1.msra.mxu0 0.0
      %427 = vmatprep.subr.mxu0 0.0
      %428 = vmatpush1.msra.mxu0 0.0
      %429 = vmatprep.subr.mxu0 0.0
      %430 = vmatpush1.msra.mxu0 0.0
      %431 = vmatprep.subr.mxu0 0.0
      %432 = vmatpush1.msra.mxu0 0.0
      %433 = vmatprep.subr.mxu0 0.0
      %434 = vmatpush1.msra.mxu0 0.0
      %435 = vmatprep.subr.mxu0 0.0
      %436 = vmatpush1.msra.mxu0 0.0
      %437 = vmatprep.subr.mxu0 0.0
      %438 = vmatpush1.msra.mxu0 0.0
      %439 = vmatprep.subr.mxu0 0.0
      %440 = vmatpush1.msra.mxu0 0.0
      %441 = vmatprep.subr.mxu0 0.0
      %442 = vmatpush1.msra.mxu0 0.0
      %443 = vmatprep.subr.mxu0 0.0
      %444 = vmatpush1.msra.mxu0 0.0
      %445 = vmatprep.subr.mxu0 0.0
      %446 = vmatpush1.msra.mxu0 0.0
      %447 = vmatprep.subr.mxu0 0.0
      %448 = vmatpush1.msra.mxu0 0.0
      %449 = vmatprep.subr.mxu0 0.0
      %450 = vmatpush1.msra.mxu0 0.0
      %451 = vmatprep.subr.mxu0 0.0
      %452 = vmatpush1.msra.mxu0 0.0
      %453 = vmatprep.subr.mxu0 0.0
      %454 = vmatpush1.msra.mxu0 0.0
      %455 = vmatprep.subr.mxu0 0.0
      %456 = vmatpush1.msra.mxu0 0.0
      %457 = vmatprep.subr.mxu0 0.0
      %458 = vmatpush1.msra.mxu0 0.0
      %459 = vmatprep.subr.mxu0 0.0
      %460 = vmatpush1.msra.mxu0 0.0
      %461 = vmatprep.subr.mxu0 0.0
      %462 = vmatpush1.msra.mxu0 0.0
      %463 = vmatprep.subr.mxu0 0.0
      %464 = vmatpush1.msra.mxu0 0.0
      %465 = vmatprep.subr.mxu0 0.0
      %466 = vmatpush1.msra.mxu0 0.0
      %467 = vmatprep.subr.mxu0 0.0
      %468 = vmatpush1.msra.mxu0 0.0
      %469 = vmatprep.subr.mxu0 0.0
      %470 = vmatpush1.msra.mxu0 0.0
      %471 = vmatprep.subr.mxu0 0.0
      %472 = vmatpush1.msra.mxu0 0.0
      %473 = vmatprep.subr.mxu0 0.0
      %474 = vmatpush1.msra.mxu0 0.0
      %475 = vmatprep.subr.mxu0 0.0
      %476 = vmatpush1.msra.mxu0 0.0
      %477 = vmatprep.subr.mxu0 0.0
      %478 = vmatpush1.msra.mxu0 0.0
      %479 = vmatprep.subr.mxu0 0.0
      %480 = vmatpush1.msra.mxu0 0.0
      %481 = vmatprep.subr.mxu0 0.0
      %482 = vmatpush1.msra.mxu0 0.0
      %483 = vmatprep.subr.mxu0 0.0
      %484 = vmatpush1.msra.mxu0 0.0
      %485 = vmatprep.mubr.f32.mxu0 0.0
      %486 = vmatmul.mubr.f32.gmra.mrb[0].mxu0 %v419
      %v487 = vpop.f32.mrb[0].mxu0
      %v488 = vadd.f32 1.0, %v487
      %v489 = vpop.f32.mrb[0].mxu0
      %490 = vdwg.mxu0
      %v491 = vmul.f32 %v406, %v406
      %v492 = vmul.f32 %v407, %v407
      %v493 = vmul.f32 %v408, %v408
      %v494 = vmul.f32 %v409, %v409
      %v495 = vmul.f32 %v410, %v410
      %v496 = vmul.f32 %v411, %v411
      %v497 = vmul.f32 %v412, %v412
      %v498 = vmul.f32 %v413, %v413
      %vm499 = vcmask 261120
      %v500 = vsel %vm499, %v491, 0.0
      %501 = vadd.xlane.f32.xlu0 %v500
      %v502 = vpop.xlane.xlu0 %501
      %v503 = vsel %vm499, %v492, 0.0
      %504 = vadd.xlane.f32.xlu0 %v503
      %v505 = vpop.xlane.xlu0 %504
      %v506 = vsel %vm499, %v493, 0.0
      %507 = vadd.xlane.f32.xlu0 %v506
      %v508 = vpop.xlane.xlu0 %507
      %v509 = vsel %vm499, %v494, 0.0
      %510 = vadd.xlane.f32.xlu0 %v509
      %v511 = vpop.xlane.xlu0 %510
      %v512 = vsel %vm499, %v495, 0.0
      %513 = vadd.xlane.f32.xlu0 %v512
      %v514 = vpop.xlane.xlu0 %513
      %v515 = vsel %vm499, %v496, 0.0
      %516 = vadd.xlane.f32.xlu0 %v515
      %v517 = vpop.xlane.xlu0 %516
      %v518 = vsel %vm499, %v497, 0.0
      %519 = vadd.xlane.f32.xlu0 %v518
      %v520 = vpop.xlane.xlu0 %519
      %v521 = vsel %vm499, %v498, 0.0
      %522 = vadd.xlane.f32.xlu0 %v521
      %v523 = vpop.xlane.xlu0 %522
      %v524 = vrcp.pop 32.0
      %v525 = vmul.f32 %v502, %v524
      %v526 = vmul.f32 %v505, %v524
      %v527 = vmul.f32 %v508, %v524
      %v528 = vmul.f32 %v511, %v524
      %v529 = vmul.f32 %v514, %v524
      %v530 = vmul.f32 %v517, %v524
      %v531 = vmul.f32 %v520, %v524
      %v532 = vmul.f32 %v523, %v524
      %v533 = vadd.f32 %v525, 1e-06
      %v534 = vadd.f32 %v526, 1e-06
      %v535 = vadd.f32 %v527, 1e-06
      %v536 = vadd.f32 %v528, 1e-06
      %v537 = vadd.f32 %v529, 1e-06
      %v538 = vadd.f32 %v530, 1e-06
      %v539 = vadd.f32 %v531, 1e-06
      %v540 = vadd.f32 %v532, 1e-06
      %v541 = vrsqrt.pop %v533
      %v542 = vrsqrt.pop %v534
      %v543 = vrsqrt.pop %v535
      %v544 = vrsqrt.pop %v536
      %v545 = vrsqrt.pop %v537
      %v546 = vrsqrt.pop %v538
      %v547 = vrsqrt.pop %v539
      %v548 = vrsqrt.pop %v540
      %v549 = vlaneseq
      %v550 = vshrl.u32 %v549, 7
      %v551 = vsub.s32 0, %v550
      %v552 = vrot.slane %v488, %v551
      %v553 = vmul.f32 %v541, %v552
      %v554 = vmul.f32 %v542, %v552
      %v555 = vmul.f32 %v543, %v552
      %v556 = vmul.f32 %v544, %v552
      %v557 = vmul.f32 %v545, %v552
      %v558 = vmul.f32 %v546, %v552
      %v559 = vmul.f32 %v547, %v552
      %v560 = vmul.f32 %v548, %v552
      %v561 = vmul.f32 %v406, %v553
      %v562 = vmul.f32 %v407, %v554
      %v563 = vmul.f32 %v408, %v555
      %v564 = vmul.f32 %v409, %v556
      %v565 = vmul.f32 %v410, %v557
      %v566 = vmul.f32 %v411, %v558
      %v567 = vmul.f32 %v412, %v559
      %v568 = vmul.f32 %v413, %v560
      %v569 = vld [vmem:[%s3] sm:$0xff]
      %v570 = vld [vmem:[%s3 + $0x8] sm:$0xff]
      %v571 = vld [vmem:[%s3 + $0x10] sm:$0xff]
      %v572 = vld [vmem:[%s3 + $0x18] sm:$0xff]
      %v574 = vsel %vm499, %v561, 0
      %v577 = vsel %vm499, %v562, 0
      %v580 = vsel %vm499, %v563, 0
      %v583 = vsel %vm499, %v564, 0
      %v586 = vsel %vm499, %v565, 0
      %v589 = vsel %vm499, %v566, 0
      %v592 = vsel %vm499, %v567, 0
      %v595 = vsel %vm499, %v568, 0
      %597 = vmatprep.subr.mxu0 0.0
      %598 = vmatpush1.msra.mxu0 %v569
      %599 = vmatprep.subr.mxu0 0.0
      %600 = vmatpush1.msra.mxu0 %v570
      %601 = vmatprep.subr.mxu0 0.0
      %602 = vmatpush1.msra.mxu0 %v571
      %603 = vmatprep.subr.mxu0 0.0
      %604 = vmatpush1.msra.mxu0 %v572
      %605 = vmatprep.subr.mxu0 0.0
      %606 = vmatpush1.msra.mxu0 0.0
      %607 = vmatprep.subr.mxu0 0.0
      %608 = vmatpush1.msra.mxu0 0.0
      %609 = vmatprep.subr.mxu0 0.0
      %610 = vmatpush1.msra.mxu0 0.0
      %611 = vmatprep.subr.mxu0 0.0
      %612 = vmatpush1.msra.mxu0 0.0
      %613 = vmatprep.subr.mxu0 0.0
      %614 = vmatpush1.msra.mxu0 0.0
      %615 = vmatprep.subr.mxu0 0.0
      %616 = vmatpush1.msra.mxu0 0.0
      %617 = vmatprep.subr.mxu0 0.0
      %618 = vmatpush1.msra.mxu0 0.0
      %619 = vmatprep.subr.mxu0 0.0
      %620 = vmatpush1.msra.mxu0 0.0
      %621 = vmatprep.subr.mxu0 0.0
      %622 = vmatpush1.msra.mxu0 0.0
      %623 = vmatprep.subr.mxu0 0.0
      %624 = vmatpush1.msra.mxu0 0.0
      %625 = vmatprep.subr.mxu0 0.0
      %626 = vmatpush1.msra.mxu0 0.0
      %627 = vmatprep.subr.mxu0 0.0
      %628 = vmatpush1.msra.mxu0 0.0
      %629 = vmatprep.subr.mxu0 0.0
      %630 = vmatpush1.msra.mxu0 0.0
      %631 = vmatprep.subr.mxu0 0.0
      %632 = vmatpush1.msra.mxu0 0.0
      %633 = vmatprep.subr.mxu0 0.0
      %634 = vmatpush1.msra.mxu0 0.0
      %635 = vmatprep.subr.mxu0 0.0
      %636 = vmatpush1.msra.mxu0 0.0
      %637 = vmatprep.subr.mxu0 0.0
      %638 = vmatpush1.msra.mxu0 0.0
      %639 = vmatprep.subr.mxu0 0.0
      %640 = vmatpush1.msra.mxu0 0.0
      %641 = vmatprep.subr.mxu0 0.0
      %642 = vmatpush1.msra.mxu0 0.0
      %643 = vmatprep.subr.mxu0 0.0
      %644 = vmatpush1.msra.mxu0 0.0
      %645 = vmatprep.subr.mxu0 0.0
      %646 = vmatpush1.msra.mxu0 0.0
      %647 = vmatprep.subr.mxu0 0.0
      %648 = vmatpush1.msra.mxu0 0.0
      %649 = vmatprep.subr.mxu0 0.0
      %650 = vmatpush1.msra.mxu0 0.0
      %651 = vmatprep.subr.mxu0 0.0
      %652 = vmatpush1.msra.mxu0 0.0
      %653 = vmatprep.subr.mxu0 0.0
      %654 = vmatpush1.msra.mxu0 0.0
      %655 = vmatprep.subr.mxu0 0.0
      %656 = vmatpush1.msra.mxu0 0.0
      %657 = vmatprep.subr.mxu0 0.0
      %658 = vmatpush1.msra.mxu0 0.0
      %659 = vmatprep.subr.mxu0 0.0
      %660 = vmatpush1.msra.mxu0 0.0
      %661 = vmatprep.mubr.f32.mxu0 0.0
      %662 = vmatmul.mubr.f32.gmra.mrb[0].mxu0 %v574
      %v663 = vpop.f32.mrb[0].mxu0
      %v664 = vadd.f32 0.0, %v663
      %v665 = vpop.f32.mrb[0].mxu0
      %666 = vmatprep.mubr.f32.mxu0 0.0
      %667 = vmatmul.mubr.f32.gmra.mrb[0].mxu0 %v577
      %v668 = vpop.f32.mrb[0].mxu0
      %v669 = vadd.f32 0.0, %v668
      %v670 = vpop.f32.mrb[0].mxu0
      %671 = vmatprep.mubr.f32.mxu0 0.0
      %672 = vmatmul.mubr.f32.gmra.mrb[0].mxu0 %v580
      %v673 = vpop.f32.mrb[0].mxu0
      %v674 = vadd.f32 0.0, %v673
      %v675 = vpop.f32.mrb[0].mxu0
      %676 = vmatprep.mubr.f32.mxu0 0.0
      %677 = vmatmul.mubr.f32.gmra.mrb[0].mxu0 %v583
      %v678 = vpop.f32.mrb[0].mxu0
      %v679 = vadd.f32 0.0, %v678
      %v680 = vpop.f32.mrb[0].mxu0
      %681 = vmatprep.mubr.f32.mxu0 0.0
      %682 = vmatmul.mubr.f32.gmra.mrb[0].mxu0 %v586
      %v683 = vpop.f32.mrb[0].mxu0
      %v684 = vadd.f32 0.0, %v683
      %v685 = vpop.f32.mrb[0].mxu0
      %686 = vmatprep.mubr.f32.mxu0 0.0
      %687 = vmatmul.mubr.f32.gmra.mrb[0].mxu0 %v589
      %v688 = vpop.f32.mrb[0].mxu0
      %v689 = vadd.f32 0.0, %v688
      %v690 = vpop.f32.mrb[0].mxu0
      %691 = vmatprep.mubr.f32.mxu0 0.0
      %692 = vmatmul.mubr.f32.gmra.mrb[0].mxu0 %v592
      %v693 = vpop.f32.mrb[0].mxu0
      %v694 = vadd.f32 0.0, %v693
      %v695 = vpop.f32.mrb[0].mxu0
      %696 = vmatprep.mubr.f32.mxu0 0.0
      %697 = vmatmul.mubr.f32.gmra.mrb[0].mxu0 %v595
      %v698 = vpop.f32.mrb[0].mxu0
      %v699 = vadd.f32 0.0, %v698
      %v700 = vpop.f32.mrb[0].mxu0
      %701 = vdwg.mxu0
      %702 = vst.msk [vmem:[%s384] sm:$0xff] %vm499, %v664
      %703 = vst.msk [vmem:[%s384 + $0x8] sm:$0xff] %vm499, %v669
      %704 = vst.msk [vmem:[%s384 + $0x10] sm:$0xff] %vm499, %v674
      %705 = vst.msk [vmem:[%s384 + $0x18] sm:$0xff] %vm499, %v679
      %706 = vst.msk [vmem:[%s384 + $0x20] sm:$0xff] %vm499, %v684
      %707 = vst.msk [vmem:[%s384 + $0x28] sm:$0xff] %vm499, %v689
      %708 = vst.msk [vmem:[%s384 + $0x30] sm:$0xff] %vm499, %v694
      %709 = vst.msk [vmem:[%s384 + $0x38] sm:$0xff] %vm499, %v699
      %v710 = vld [vmem:[%s4] sm:$0xff]
      %v711 = vld [vmem:[%s4 + $0x8] sm:$0xff]
      %v712 = vld [vmem:[%s4 + $0x10] sm:$0xff]
      %v713 = vld [vmem:[%s4 + $0x18] sm:$0xff]
      %714 = vmatprep.subr.mxu0 0.0
      %715 = vmatpush1.msra.mxu0 %v710
      %716 = vmatprep.subr.mxu0 0.0
      %717 = vmatpush1.msra.mxu0 %v711
      %718 = vmatprep.subr.mxu0 0.0
      %719 = vmatpush1.msra.mxu0 %v712
      %720 = vmatprep.subr.mxu0 0.0
      %721 = vmatpush1.msra.mxu0 %v713
      %722 = vmatprep.subr.mxu0 0.0
      %723 = vmatpush1.msra.mxu0 0.0
      %724 = vmatprep.subr.mxu0 0.0
      %725 = vmatpush1.msra.mxu0 0.0
      %726 = vmatprep.subr.mxu0 0.0
      %727 = vmatpush1.msra.mxu0 0.0
      %728 = vmatprep.subr.mxu0 0.0
      %729 = vmatpush1.msra.mxu0 0.0
      %730 = vmatprep.subr.mxu0 0.0
      %731 = vmatpush1.msra.mxu0 0.0
      %732 = vmatprep.subr.mxu0 0.0
      %733 = vmatpush1.msra.mxu0 0.0
      %734 = vmatprep.subr.mxu0 0.0
      %735 = vmatpush1.msra.mxu0 0.0
      %736 = vmatprep.subr.mxu0 0.0
      %737 = vmatpush1.msra.mxu0 0.0
      %738 = vmatprep.subr.mxu0 0.0
      %739 = vmatpush1.msra.mxu0 0.0
      %740 = vmatprep.subr.mxu0 0.0
      %741 = vmatpush1.msra.mxu0 0.0
      %742 = vmatprep.subr.mxu0 0.0
      %743 = vmatpush1.msra.mxu0 0.0
      %744 = vmatprep.subr.mxu0 0.0
      %745 = vmatpush1.msra.mxu0 0.0
      %746 = vmatprep.subr.mxu0 0.0
      %747 = vmatpush1.msra.mxu0 0.0
      %748 = vmatprep.subr.mxu0 0.0
      %749 = vmatpush1.msra.mxu0 0.0
      %750 = vmatprep.subr.mxu0 0.0
      %751 = vmatpush1.msra.mxu0 0.0
      %752 = vmatprep.subr.mxu0 0.0
      %753 = vmatpush1.msra.mxu0 0.0
      %754 = vmatprep.subr.mxu0 0.0
      %755 = vmatpush1.msra.mxu0 0.0
      %756 = vmatprep.subr.mxu0 0.0
      %757 = vmatpush1.msra.mxu0 0.0
      %758 = vmatprep.subr.mxu0 0.0
      %759 = vmatpush1.msra.mxu0 0.0
      %760 = vmatprep.subr.mxu0 0.0
      %761 = vmatpush1.msra.mxu0 0.0
      %762 = vmatprep.subr.mxu0 0.0
      %763 = vmatpush1.msra.mxu0 0.0
      %764 = vmatprep.subr.mxu0 0.0
      %765 = vmatpush1.msra.mxu0 0.0
      %766 = vmatprep.subr.mxu0 0.0
      %767 = vmatpush1.msra.mxu0 0.0
      %768 = vmatprep.subr.mxu0 0.0
      %769 = vmatpush1.msra.mxu0 0.0
      %770 = vmatprep.subr.mxu0 0.0
      %771 = vmatpush1.msra.mxu0 0.0
      %772 = vmatprep.subr.mxu0 0.0
      %773 = vmatpush1.msra.mxu0 0.0
      %774 = vmatprep.subr.mxu0 0.0
      %775 = vmatpush1.msra.mxu0 0.0
      %776 = vmatprep.subr.mxu0 0.0
      %777 = vmatpush1.msra.mxu0 0.0
      %778 = vmatprep.mubr.f32.mxu0 0.0
      %779 = vmatmul.mubr.f32.gmra.mrb[0].mxu0 %v574
      %v780 = vpop.f32.mrb[0].mxu0
      %v781 = vadd.f32 0.0, %v780
      %v782 = vpop.f32.mrb[0].mxu0
      %783 = vmatprep.mubr.f32.mxu0 0.0
      %784 = vmatmul.mubr.f32.gmra.mrb[0].mxu0 %v577
      %v785 = vpop.f32.mrb[0].mxu0
      %v786 = vadd.f32 0.0, %v785
      %v787 = vpop.f32.mrb[0].mxu0
      %788 = vmatprep.mubr.f32.mxu0 0.0
      %789 = vmatmul.mubr.f32.gmra.mrb[0].mxu0 %v580
      %v790 = vpop.f32.mrb[0].mxu0
      %v791 = vadd.f32 0.0, %v790
      %v792 = vpop.f32.mrb[0].mxu0
      %793 = vmatprep.mubr.f32.mxu0 0.0
      %794 = vmatmul.mubr.f32.gmra.mrb[0].mxu0 %v583
      %v795 = vpop.f32.mrb[0].mxu0
      %v796 = vadd.f32 0.0, %v795
      %v797 = vpop.f32.mrb[0].mxu0
      %798 = vmatprep.mubr.f32.mxu0 0.0
      %799 = vmatmul.mubr.f32.gmra.mrb[0].mxu0 %v586
      %v800 = vpop.f32.mrb[0].mxu0
      %v801 = vadd.f32 0.0, %v800
      %v802 = vpop.f32.mrb[0].mxu0
      %803 = vmatprep.mubr.f32.mxu0 0.0
      %804 = vmatmul.mubr.f32.gmra.mrb[0].mxu0 %v589
      %v805 = vpop.f32.mrb[0].mxu0
      %v806 = vadd.f32 0.0, %v805
      %v807 = vpop.f32.mrb[0].mxu0
      %808 = vmatprep.mubr.f32.mxu0 0.0
      %809 = vmatmul.mubr.f32.gmra.mrb[0].mxu0 %v592
      %v810 = vpop.f32.mrb[0].mxu0
      %v811 = vadd.f32 0.0, %v810
      %v812 = vpop.f32.mrb[0].mxu0
      %813 = vmatprep.mubr.f32.mxu0 0.0
      %814 = vmatmul.mubr.f32.gmra.mrb[0].mxu0 %v595
      %v815 = vpop.f32.mrb[0].mxu0
      %v816 = vadd.f32 0.0, %v815
      %v817 = vpop.f32.mrb[0].mxu0
      %818 = vdwg.mxu0
      %819 = vst.msk [vmem:[%s394] sm:$0xff] %vm499, %v781
      %820 = vst.msk [vmem:[%s394 + $0x8] sm:$0xff] %vm499, %v786
      %821 = vst.msk [vmem:[%s394 + $0x10] sm:$0xff] %vm499, %v791
      %822 = vst.msk [vmem:[%s394 + $0x18] sm:$0xff] %vm499, %v796
      %823 = vst.msk [vmem:[%s394 + $0x20] sm:$0xff] %vm499, %v801
      %824 = vst.msk [vmem:[%s394 + $0x28] sm:$0xff] %vm499, %v806
      %825 = vst.msk [vmem:[%s394 + $0x30] sm:$0xff] %vm499, %v811
      %826 = vst.msk [vmem:[%s394 + $0x38] sm:$0xff] %vm499, %v816
      %v827 = vld [vmem:[%s5] sm:$0xff]
      %v828 = vld [vmem:[%s5 + $0x8] sm:$0xff]
      %v829 = vld [vmem:[%s5 + $0x10] sm:$0xff]
      %v830 = vld [vmem:[%s5 + $0x18] sm:$0xff]
      %831 = vmatprep.subr.mxu0 0.0
      %832 = vmatpush1.msra.mxu0 %v827
      %833 = vmatprep.subr.mxu0 0.0
      %834 = vmatpush1.msra.mxu0 %v828
      %835 = vmatprep.subr.mxu0 0.0
      %836 = vmatpush1.msra.mxu0 %v829
      %837 = vmatprep.subr.mxu0 0.0
      %838 = vmatpush1.msra.mxu0 %v830
      %839 = vmatprep.subr.mxu0 0.0
      %840 = vmatpush1.msra.mxu0 0.0
      %841 = vmatprep.subr.mxu0 0.0
      %842 = vmatpush1.msra.mxu0 0.0
      %843 = vmatprep.subr.mxu0 0.0
      %844 = vmatpush1.msra.mxu0 0.0
      %845 = vmatprep.subr.mxu0 0.0
      %846 = vmatpush1.msra.mxu0 0.0
      %847 = vmatprep.subr.mxu0 0.0
      %848 = vmatpush1.msra.mxu0 0.0
      %849 = vmatprep.subr.mxu0 0.0
      %850 = vmatpush1.msra.mxu0 0.0
      %851 = vmatprep.subr.mxu0 0.0
      %852 = vmatpush1.msra.mxu0 0.0
      %853 = vmatprep.subr.mxu0 0.0
      %854 = vmatpush1.msra.mxu0 0.0
      %855 = vmatprep.subr.mxu0 0.0
      %856 = vmatpush1.msra.mxu0 0.0
      %857 = vmatprep.subr.mxu0 0.0
      %858 = vmatpush1.msra.mxu0 0.0
      %859 = vmatprep.subr.mxu0 0.0
      %860 = vmatpush1.msra.mxu0 0.0
      %861 = vmatprep.subr.mxu0 0.0
      %862 = vmatpush1.msra.mxu0 0.0
      %863 = vmatprep.subr.mxu0 0.0
      %864 = vmatpush1.msra.mxu0 0.0
      %865 = vmatprep.subr.mxu0 0.0
      %866 = vmatpush1.msra.mxu0 0.0
      %867 = vmatprep.subr.mxu0 0.0
      %868 = vmatpush1.msra.mxu0 0.0
      %869 = vmatprep.subr.mxu0 0.0
      %870 = vmatpush1.msra.mxu0 0.0
      %871 = vmatprep.subr.mxu0 0.0
      %872 = vmatpush1.msra.mxu0 0.0
      %873 = vmatprep.subr.mxu0 0.0
      %874 = vmatpush1.msra.mxu0 0.0
      %875 = vmatprep.subr.mxu0 0.0
      %876 = vmatpush1.msra.mxu0 0.0
      %877 = vmatprep.subr.mxu0 0.0
      %878 = vmatpush1.msra.mxu0 0.0
      %879 = vmatprep.subr.mxu0 0.0
      %880 = vmatpush1.msra.mxu0 0.0
      %881 = vmatprep.subr.mxu0 0.0
      %882 = vmatpush1.msra.mxu0 0.0
      %883 = vmatprep.subr.mxu0 0.0
      %884 = vmatpush1.msra.mxu0 0.0
      %885 = vmatprep.subr.mxu0 0.0
      %886 = vmatpush1.msra.mxu0 0.0
      %887 = vmatprep.subr.mxu0 0.0
      %888 = vmatpush1.msra.mxu0 0.0
      %889 = vmatprep.subr.mxu0 0.0
      %890 = vmatpush1.msra.mxu0 0.0
      %891 = vmatprep.subr.mxu0 0.0
      %892 = vmatpush1.msra.mxu0 0.0
      %893 = vmatprep.subr.mxu0 0.0
      %894 = vmatpush1.msra.mxu0 0.0
      %895 = vmatprep.mubr.f32.mxu0 0.0
      %896 = vmatmul.mubr.f32.gmra.mrb[0].mxu0 %v574
      %v897 = vpop.f32.mrb[0].mxu0
      %v898 = vadd.f32 0.0, %v897
      %v899 = vpop.f32.mrb[0].mxu0
      %900 = vmatprep.mubr.f32.mxu0 0.0
      %901 = vmatmul.mubr.f32.gmra.mrb[0].mxu0 %v577
      %v902 = vpop.f32.mrb[0].mxu0
      %v903 = vadd.f32 0.0, %v902
      %v904 = vpop.f32.mrb[0].mxu0
      %905 = vmatprep.mubr.f32.mxu0 0.0
      %906 = vmatmul.mubr.f32.gmra.mrb[0].mxu0 %v580
      %v907 = vpop.f32.mrb[0].mxu0
      %v908 = vadd.f32 0.0, %v907
      %v909 = vpop.f32.mrb[0].mxu0
      %910 = vmatprep.mubr.f32.mxu0 0.0
      %911 = vmatmul.mubr.f32.gmra.mrb[0].mxu0 %v583
      %v912 = vpop.f32.mrb[0].mxu0
      %v913 = vadd.f32 0.0, %v912
      %v914 = vpop.f32.mrb[0].mxu0
      %915 = vmatprep.mubr.f32.mxu0 0.0
      %916 = vmatmul.mubr.f32.gmra.mrb[0].mxu0 %v586
      %v917 = vpop.f32.mrb[0].mxu0
      %v918 = vadd.f32 0.0, %v917
      %v919 = vpop.f32.mrb[0].mxu0
      %920 = vmatprep.mubr.f32.mxu0 0.0
      %921 = vmatmul.mubr.f32.gmra.mrb[0].mxu0 %v589
      %v922 = vpop.f32.mrb[0].mxu0
      %v923 = vadd.f32 0.0, %v922
      %v924 = vpop.f32.mrb[0].mxu0
      %925 = vmatprep.mubr.f32.mxu0 0.0
      %926 = vmatmul.mubr.f32.gmra.mrb[0].mxu0 %v592
      %v927 = vpop.f32.mrb[0].mxu0
      %v928 = vadd.f32 0.0, %v927
      %v929 = vpop.f32.mrb[0].mxu0
      %930 = vmatprep.mubr.f32.mxu0 0.0
      %931 = vmatmul.mubr.f32.gmra.mrb[0].mxu0 %v595
      %v932 = vpop.f32.mrb[0].mxu0
      %v933 = vadd.f32 0.0, %v932
      %v934 = vpop.f32.mrb[0].mxu0
      %935 = vdwg.mxu0
      %936 = vst.msk [vmem:[%s404] sm:$0xff] %vm499, %v898
      %937 = vst.msk [vmem:[%s404 + $0x8] sm:$0xff] %vm499, %v903
      %938 = vst.msk [vmem:[%s404 + $0x10] sm:$0xff] %vm499, %v908
      %939 = vst.msk [vmem:[%s404 + $0x18] sm:$0xff] %vm499, %v913
      %940 = vst.msk [vmem:[%s404 + $0x20] sm:$0xff] %vm499, %v918
      %941 = vst.msk [vmem:[%s404 + $0x28] sm:$0xff] %vm499, %v923
      %942 = vst.msk [vmem:[%s404 + $0x30] sm:$0xff] %vm499, %v928
      %943 = vst.msk [vmem:[%s404 + $0x38] sm:$0xff] %vm499, %v933
      %s944 = smul.u32 8, %s25
      %p945 = scmp.lt.s32.totalorder %s24, 1
      %s946 = scalar_select %p945, %s24, 1
      %p947 = scmp.lt.s32.totalorder %s944, 7
      %s948 = scalar_select %p947, %s944, 7
      %s949 = smul.addr %s946, 8
      %s950 = sadd.s32 %s948, %s949
      %s951 = smul.addr %s950, 8
      %s952 = scalar_lea.vmem %s6, %s951
      %s953 = smul.u32 8, %s25
      %p954 = scmp.lt.s32.totalorder %s24, 1
      %s955 = scalar_select %p954, %s24, 1
      %p956 = scmp.lt.s32.totalorder %s953, 7
      %s957 = scalar_select %p956, %s953, 7
      %s958 = smul.addr %s955, 8
      %s959 = sadd.s32 %s957, %s958
      %s960 = smul.addr %s959, 8
      %s961 = scalar_lea.vmem %s7, %s960
      %s962 = smul.u32 8, %s25
      %p963 = scmp.lt.s32.totalorder %s24, 1
      %s964 = scalar_select %p963, %s24, 1
      %p965 = scmp.lt.s32.totalorder %s962, 7
      %s966 = scalar_select %p965, %s962, 7
      %s967 = smul.addr %s964, 8
      %s968 = sadd.s32 %s966, %s967
      %s969 = smul.addr %s968, 8
      %s970 = scalar_lea.vmem %s8, %s969
      // Predicated region
      $region45: #{tpu_custom_call.1} parent=43 // pred_check
        %p971 = pneg %p190
      $region46: #{tpu_custom_call.1} parent=43 // pred_check_branch
        %973 = sbr.rel (%p971) target = $region48
      $region47: #{tpu_custom_call.1} parent=43 // pred_region
        %s974 = smul.u32 8, %s25
      $region48: #{tpu_custom_call.1} parent=43 // pred_fallthru
        _
      // Predicated region
      $region49: #{tpu_custom_call.1} parent=43 // pred_check
        %p975 = pneg %p218
      $region50: #{tpu_custom_call.1} parent=43 // pred_check_branch
        %977 = sbr.rel (%p975) target = $region52
      $region51: #{tpu_custom_call.1} parent=43 // pred_region
        %s978 = smul.u32 8, %s25
      $region52: #{tpu_custom_call.1} parent=43 // pred_fallthru
        _
      // Predicated region
      $region53: #{tpu_custom_call.1} parent=43 // pred_check
        %p979 = pneg %p246
      $region54: #{tpu_custom_call.1} parent=43 // pred_check_branch
        %981 = sbr.rel (%p979) target = $region56
      $region55: #{tpu_custom_call.1} parent=43 // pred_region
        %s982 = smul.u32 8, %s25
      $region56: #{tpu_custom_call.1} parent=43 // pred_fallthru
        _
    $region44: #{tpu_custom_call.1} parent=5 // pred_fallthru
      _
    %p983 = scmp.le.s32.totalorder 2, %s15
    // Predicated region
    $region57: #{tpu_custom_call.1} parent=5 // pred_check
      %p984 = pneg %p983
    $region58: #{tpu_custom_call.1} parent=5 // pred_check_branch
      %986 = sbr.rel (%p984) target = $region60
    $region59: #{tpu_custom_call.1} parent=5 // pred_region
      %s987 = ssub.s32 %s15, 2
      // Predicated region
      $region61: #{tpu_custom_call.1} parent=59 // pred_check
        %p988 = pneg %p196
      $region62: #{tpu_custom_call.1} parent=59 // pred_check_branch
        %990 = sbr.rel (%p988) target = $region64
      $region63: #{tpu_custom_call.1} parent=59 // pred_region
        %s991 = smul.u32 8, %s27
        %p992 = scmp.lt.s32.totalorder %s26, 1
        %s993 = scalar_select %p992, %s26, 1
        %p994 = scmp.lt.s32.totalorder %s991, 7
        %s995 = scalar_select %p994, %s991, 7
        %s996 = smul.addr %s993, 8
        %s997 = sadd.s32 %s995, %s996
        %s998 = smul.addr %s997, 8
        %s999 = scalar_lea.vmem %s6, %s998
      $region64: #{tpu_custom_call.1} parent=59 // pred_fallthru
        _
      // Predicated region
      $region65: #{tpu_custom_call.1} parent=59 // pred_check
        %p1000 = pneg %p224
      $region66: #{tpu_custom_call.1} parent=59 // pred_check_branch
        %1002 = sbr.rel (%p1000) target = $region68
      $region67: #{tpu_custom_call.1} parent=59 // pred_region
        %s1003 = smul.u32 8, %s27
        %p1004 = scmp.lt.s32.totalorder %s26, 1
        %s1005 = scalar_select %p1004, %s26, 1
        %p1006 = scmp.lt.s32.totalorder %s1003, 7
        %s1007 = scalar_select %p1006, %s1003, 7
        %s1008 = smul.addr %s1005, 8
        %s1009 = sadd.s32 %s1007, %s1008
        %s1010 = smul.addr %s1009, 8
        %s1011 = scalar_lea.vmem %s7, %s1010
      $region68: #{tpu_custom_call.1} parent=59 // pred_fallthru
        _
      // Predicated region
      $region69: #{tpu_custom_call.1} parent=59 // pred_check
        %p1012 = pneg %p252
      $region70: #{tpu_custom_call.1} parent=59 // pred_check_branch
        %1014 = sbr.rel (%p1012) target = $region72
      $region71: #{tpu_custom_call.1} parent=59 // pred_region
        %s1015 = smul.u32 8, %s27
        %p1016 = scmp.lt.s32.totalorder %s26, 1
        %s1017 = scalar_select %p1016, %s26, 1
        %p1018 = scmp.lt.s32.totalorder %s1015, 7
        %s1019 = scalar_select %p1018, %s1015, 7
        %s1020 = smul.addr %s1017, 8
        %s1021 = sadd.s32 %s1019, %s1020
        %s1022 = smul.addr %s1021, 8
        %s1023 = scalar_lea.vmem %s8, %s1022
      $region72: #{tpu_custom_call.1} parent=59 // pred_fallthru
        _
    $region60: #{tpu_custom_call.1} parent=5 // pred_fallthru
      _
  $region6: #{tpu_custom_call.1} parent=0 // loop_footer
    %s19 = sadd.s32 1, %s15
  $region7: #{tpu_custom_call.1} parent=0 // loop_footer_branch
    %14 = sbr.rel target = $region3
  $region8: #{tpu_custom_call.1} parent=0 // loop_exit
    _

</llo_original>
